<compile_context>
chip_gen: v7x
topology: tpu7x:2x2x1
jax: 0.10.0
libtpu: 0.0.40
codegen_flags: <defaults>
</compile_context>

<pallas_src>
import functools

import jax
import jax.numpy as jnp
from jax import lax
from jax.experimental import pallas as pl
from jax.experimental.pallas import tpu as pltpu

HEAD_ROWS = 8    # row 0 = alpha head, row 1 = beta head, rows 2..7 = zero padding


def _round_up(n, m):
    return ((n + m - 1) // m) * m


def _softplus(x):
    # numerically-stable softplus (matches torch.nn.Softplus with default beta=1)
    return jnp.maximum(x, 0.0) + jnp.log1p(jnp.exp(-jnp.abs(x)))


def actor_kernel(x_ref,
                 w1_ref,
                 w2_ref, b2_ref,
                 w3_ref, b3_ref,
                 wh_ref, bh_ref,
                 out_ref):
    # x_ref: (TILE_B, FEAT_PAD) in natural layout (batch on sublanes, features on lanes).
    # Column FEAT (== original feature dim) of x is 1.0, so the b1 bias is folded into W1.
    x = x_ref[...]
    w1 = w1_ref[...]                                    # (256, FEAT_PAD), bias in column FEAT

    # Layer 1 directly into transposed layout: h = W1 @ x^T -> (256, TILE_B).
    # Contracting both last (feature) axes lets Mosaic do the small per-tile
    # transpose on-chip instead of a wrapper-side HBM transpose of x.
    h = lax.dot_general(w1, x, (((1,), (1,)), ((), ())),
                        preferred_element_type=jnp.float32)
    h = jnp.maximum(h, 0.0)

    w2 = w2_ref[...]                                    # (128, 256)
    h = jnp.dot(w2, h.astype(w2.dtype), preferred_element_type=jnp.float32) + b2_ref[...]
    h = jnp.maximum(h, 0.0)

    w3 = w3_ref[...]                                    # (64, 128)
    h = jnp.dot(w3, h.astype(w3.dtype), preferred_element_type=jnp.float32) + b3_ref[...]
    h = jnp.maximum(h, 0.0)

    # Fused alpha/beta heads: one (8, 64) x (64, TILE_B) matmul, one softplus,
    # one lane-dense (8, TILE_B) output store.
    wh = wh_ref[...]
    z = jnp.dot(wh, h.astype(wh.dtype), preferred_element_type=jnp.float32) + bh_ref[...]
    out_ref[...] = _softplus(z) + 1.0


def pack_params(params, feat_dim, *, feat_pad=None, compute_dtype=jnp.bfloat16):
    """Re-pack reference-layout params ((in,out) weights, (1,out) biases) into kernel
    operands.  Done once, outside the hot path.

    * Weights are transposed to (out, in) for the transposed compute.
    * W1's input dim is zero-padded to `feat_pad` (feat_dim + 1 bias column, rounded up
      to a multiple of 16 for bf16 sublane packing); b1 is folded into column feat_dim.
    * The two 64->1 heads are fused into one sublane-aligned (HEAD_ROWS, 64) weight.
    * `compute_dtype=jnp.bfloat16` (default) halves x/weight HBM bytes and doubles MXU
      rate on v6e/v7x; all dots keep f32 accumulation and all elementwise math stays f32.
      Pass `jnp.float32` for exact parity with the PyTorch module.
    """
    (w1, b1), (w2, b2), (w3, b3), (wa, ba), (wb, bb) = params

    if feat_pad is None:
        feat_pad = _round_up(feat_dim + 1, 16)          # +1 for the folded-bias ones column
    assert feat_pad >= feat_dim + 1

    w1t = jnp.zeros((w1.shape[1], feat_pad), jnp.float32)
    w1t = w1t.at[:, :feat_dim].set(w1.T).at[:, feat_dim].set(b1[0, :])   # fold b1

    w2t = jnp.asarray(w2.T)
    w3t = jnp.asarray(w3.T)

    hid = w3.shape[1]
    wh = jnp.zeros((HEAD_ROWS, hid), jnp.float32)
    wh = wh.at[0, :].set(wa[:, 0]).at[1, :].set(wb[:, 0])
    bh = jnp.zeros((HEAD_ROWS, 1), jnp.float32)
    bh = bh.at[0, 0].set(ba[0, 0]).at[1, 0].set(bb[0, 0])

    cast = lambda w: w.astype(compute_dtype)
    return (cast(w1t),
            cast(w2t), b2.T.astype(jnp.float32),
            cast(w3t), b3.T.astype(jnp.float32),
            cast(wh), bh.astype(jnp.float32))


def _choose_tile_b(batch):
    """Batch tile (lane axis), multiple of 128.  Prefer >=2 tiles when the batch allows
    it (uses both TensorCores on v7x via the "parallel" grid axis), cap tiles at 512
    lanes (keeps per-step DMA well above the ~0.35us step overhead without bloating
    VMEM)."""
    b128 = _round_up(max(int(batch), 1), 128)
    if b128 <= 128:
        return 128
    return min(512, _round_up(b128 // 2, 128))


def actor_forward(x, packed_params, *, tile_b=None, x_buffers=None):
    """x: (B, state_stack, input_dim) float32.  Returns (alpha, beta), each (B, 1) f32.

    tile_b: batch tile (multiple of 128); None -> auto (_choose_tile_b).
    x_buffers: optional pipeline depth for the streaming x operand (e.g. 3 on v7x if a
    profile shows exposed DMA issue latency); None -> default double buffering.
    """
    w1t, w2t, b2, w3t, b3, wh, bh = packed_params
    compute_dtype = w1t.dtype
    feat_pad = w1t.shape[1]

    B = x.shape[0]
    x_flat = x.reshape(B, -1)                            # same as torch .view(B, -1)
    F = x_flat.shape[1]
    assert F + 1 <= feat_pad

    if tile_b is None:
        tile_b = _choose_tile_b(B)
    n_tiles = -(-B // tile_b)
    b_pad = n_tiles * tile_b

    # Single wrapper pass over x: cast to compute dtype, pad batch/features, set the
    # bias-fold ones column.  Natural (batch, feature) layout -> no HBM transpose pass.
    x_p = jnp.zeros((b_pad, feat_pad), compute_dtype)
    x_p = x_p.at[:B, :F].set(x_flat.astype(compute_dtype))
    x_p = x_p.at[:, F].set(1.0)                          # ones column for folded b1

    operands = (x_p, w1t, w2t, b2, w3t, b3, wh, bh)

    def resident(op):
        # Constant index_map: operand stays VMEM-resident across all batch tiles.
        n = op.ndim
        return pl.BlockSpec(op.shape, lambda i: (0,) * n)

    x_spec_kwargs = {}
    if x_buffers is not None and x_buffers != 2:
        x_spec_kwargs["pipeline_mode"] = pl.Buffered(x_buffers)
    x_spec = pl.BlockSpec((tile_b, feat_pad), lambda i: (i, 0), **x_spec_kwargs)

    out = pl.pallas_call(
        actor_kernel,
        out_shape=jax.ShapeDtypeStruct((HEAD_ROWS, b_pad), jnp.float32),
        grid_spec=pl.GridSpec(
            grid=(n_tiles,),
            in_specs=[x_spec] + [resident(op) for op in operands[1:]],
            out_specs=pl.BlockSpec((HEAD_ROWS, tile_b), lambda i: (0, i)),
        ),
        compiler_params=pltpu.CompilerParams(
            # batch tiles are independent -> split across TensorCores on v7x
            dimension_semantics=("parallel",),
        ),
    )(*operands)

    # One contiguous slab off the kernel output, then split into the module's outputs.
    ab = out[:2, :B]                                     # (2, B)
    alpha = ab[0:1, :].T                                 # (B, 1)
    beta = ab[1:2, :].T                                  # (B, 1)
    return alpha, beta


def init_params(key, in_features, architecture=(256, 128, 64), output_dim=1):
    """Deterministic synthetic init. Weights stored as (in, out); biases as (1, out)."""
    dims = [in_features] + list(architecture)
    keys = jax.random.split(key, len(dims) + 1)
    params = []
    for i, (din, dout) in enumerate(zip(dims[:-1], dims[1:])):
        w = jax.random.normal(keys[i], (din, dout), jnp.float32) * (1.0 / jnp.sqrt(din))
        b = jnp.full((1, dout), 0.01, jnp.float32)
        params.append((w, b))
    ka, kb = jax.random.split(keys[-1])
    wa = jax.random.normal(ka, (dims[-1], output_dim), jnp.float32) * (1.0 / jnp.sqrt(dims[-1]))
    ba = jnp.full((1, output_dim), 0.01, jnp.float32)
    wb = jax.random.normal(kb, (dims[-1], output_dim), jnp.float32) * (1.0 / jnp.sqrt(dims[-1]))
    bb = jnp.full((1, output_dim), 0.01, jnp.float32)
    params.append((wa, ba))
    params.append((wb, bb))
    return tuple(params)


def actor_reference(x, params):
    """Pure-JAX reference for correctness check (uses the unpacked torch-like params)."""
    (w1, b1), (w2, b2), (w3, b3), (wa, ba), (wb, bb) = params
    h = x.reshape(x.shape[0], -1)
    h = jnp.maximum(h @ w1 + b1, 0.0)
    h = jnp.maximum(h @ w2 + b2, 0.0)
    h = jnp.maximum(h @ w3 + b3, 0.0)
    alpha = jax.nn.softplus(h @ wa + ba) + 1.0
    beta = jax.nn.softplus(h @ wb + bb) + 1.0
    return alpha, beta


if __name__ == "__main__":
    # Small deterministic example consistent with the module:
    # state_stack=4 frames of an 11-dim state, batch=2.
    B, state_stack, input_dim = 2, 4, 11
    key = jax.random.PRNGKey(0)
    kx, kp = jax.random.split(key)

    x = jax.random.normal(kx, (B, state_stack, input_dim), jnp.float32)
    params = init_params(kp, state_stack * input_dim)
    alpha_ref, beta_ref = actor_reference(x, params)

    fwd = jax.jit(functools.partial(actor_forward))

    # 1) f32 operands: exact-parity check against the pure-JAX reference.
    packed_f32 = pack_params(params, state_stack * input_dim, compute_dtype=jnp.float32)
    a32, b32 = fwd(x, packed_f32)
    a32, b32 = jax.block_until_ready(a32), jax.block_until_ready(b32)
    assert a32.shape == (B, 1) and b32.shape == (B, 1)
    assert jnp.allclose(a32, alpha_ref, atol=1e-4, rtol=1e-4)
    assert jnp.allclose(b32, beta_ref, atol=1e-4, rtol=1e-4)

    # 2) bf16 operands (deployment default): looser tolerance, f32 accumulation inside.
    packed_bf16 = pack_params(params, state_stack * input_dim)   # compute_dtype=bfloat16
    a16, b16 = fwd(x, packed_bf16)
    a16, b16 = jax.block_until_ready(a16), jax.block_until_ready(b16)
    assert a16.shape == (B, 1) and b16.shape == (B, 1)
    assert jnp.allclose(a16, alpha_ref, atol=5e-2, rtol=5e-2)
    assert jnp.allclose(b16, beta_ref, atol=5e-2, rtol=5e-2)

    assert bool(jnp.all(a32 > 1.0)) and bool(jnp.all(b32 > 1.0))
    assert bool(jnp.all(a16 >= 1.0)) and bool(jnp.all(b16 >= 1.0))

    print("KERNEL_OK")
</pallas_src>

<mosaic_0001>
module attributes {stable_mosaic.version = 11 : i64} {
  func.func @actor_kernel(%arg0: i32, %arg1: memref<128x48xf32, #tpu.memory_space<vmem>>, %arg2: memref<256x48xf32, #tpu.memory_space<vmem>>, %arg3: memref<128x256xf32, #tpu.memory_space<vmem>>, %arg4: memref<128x1xf32, #tpu.memory_space<vmem>>, %arg5: memref<64x128xf32, #tpu.memory_space<vmem>>, %arg6: memref<64x1xf32, #tpu.memory_space<vmem>>, %arg7: memref<8x64xf32, #tpu.memory_space<vmem>>, %arg8: memref<8x1xf32, #tpu.memory_space<vmem>>, %arg9: memref<8x128xf32, #tpu.memory_space<vmem>>) attributes {dimension_semantics = [#tpu.dimension_semantics<parallel>], iteration_bounds = array<i64: 1>, scalar_prefetch = 0 : i64, scratch_operands = 0 : i64, tpu.core_type = #tpu.core_type<tc>, window_params = [{transform_indices = @transform_0, window_bounds = array<i64: 128, 48>}, {pipeline_mode = #tpu.pipeline_mode<synchronous>, transform_indices = @transform_1, window_bounds = array<i64: 256, 48>}, {pipeline_mode = #tpu.pipeline_mode<synchronous>, transform_indices = @transform_2, window_bounds = array<i64: 128, 256>}, {pipeline_mode = #tpu.pipeline_mode<synchronous>, transform_indices = @transform_3, window_bounds = array<i64: 128, 1>}, {pipeline_mode = #tpu.pipeline_mode<synchronous>, transform_indices = @transform_4, window_bounds = array<i64: 64, 128>}, {pipeline_mode = #tpu.pipeline_mode<synchronous>, transform_indices = @transform_5, window_bounds = array<i64: 64, 1>}, {pipeline_mode = #tpu.pipeline_mode<synchronous>, transform_indices = @transform_6, window_bounds = array<i64: 8, 64>}, {pipeline_mode = #tpu.pipeline_mode<synchronous>, transform_indices = @transform_7, window_bounds = array<i64: 8, 1>}, {transform_indices = @transform_8, window_bounds = array<i64: 8, 128>}]} {
    %c0 = arith.constant 0 : index
    %c0_0 = arith.constant 0 : index
    %0 = vector.load %arg1[%c0, %c0_0] : memref<128x48xf32, #tpu.memory_space<vmem>>, vector<128x48xf32>
    %c0_1 = arith.constant 0 : index
    %c0_2 = arith.constant 0 : index
    %1 = vector.load %arg2[%c0_1, %c0_2] : memref<256x48xf32, #tpu.memory_space<vmem>>, vector<256x48xf32>
    %cst = arith.constant dense<0.000000e+00> : vector<256x128xf32>
    %2 = tpu.matmul %1, %0, %cst {dimension_numbers = #tpu.dot_dimension_numbers<[1], [1], [0], [0], [0, 0, 1, 0], [], []>} : vector<256x48xf32>, vector<128x48xf32>, vector<256x128xf32> -> vector<256x128xf32>
    %cst_3 = arith.constant 0.000000e+00 : f32
    %3 = vector.broadcast %cst_3 : f32 to vector<256x128xf32>
    %4 = arith.maximumf %2, %3 : vector<256x128xf32>
    %c0_4 = arith.constant 0 : index
    %c0_5 = arith.constant 0 : index
    %5 = vector.load %arg3[%c0_4, %c0_5] : memref<128x256xf32, #tpu.memory_space<vmem>>, vector<128x256xf32>
    %cst_6 = arith.constant dense<0.000000e+00> : vector<128x128xf32>
    %6 = tpu.matmul %5, %4, %cst_6 {dimension_numbers = #tpu.dot_dimension_numbers<[1], [0], [0], [1], [0, 0, 1, 1], [], []>} : vector<128x256xf32>, vector<256x128xf32>, vector<128x128xf32> -> vector<128x128xf32>
    %c0_7 = arith.constant 0 : index
    %c0_8 = arith.constant 0 : index
    %7 = vector.load %arg4[%c0_7, %c0_8] : memref<128x1xf32, #tpu.memory_space<vmem>>, vector<128x1xf32>
    %8 = vector.broadcast %7 : vector<128x1xf32> to vector<128x128xf32>
    %9 = arith.addf %6, %8 : vector<128x128xf32>
    %cst_9 = arith.constant 0.000000e+00 : f32
    %10 = vector.broadcast %cst_9 : f32 to vector<128x128xf32>
    %11 = arith.maximumf %9, %10 : vector<128x128xf32>
    %c0_10 = arith.constant 0 : index
    %c0_11 = arith.constant 0 : index
    %12 = vector.load %arg5[%c0_10, %c0_11] : memref<64x128xf32, #tpu.memory_space<vmem>>, vector<64x128xf32>
    %cst_12 = arith.constant dense<0.000000e+00> : vector<64x128xf32>
    %13 = tpu.matmul %12, %11, %cst_12 {dimension_numbers = #tpu.dot_dimension_numbers<[1], [0], [0], [1], [0, 0, 1, 1], [], []>} : vector<64x128xf32>, vector<128x128xf32>, vector<64x128xf32> -> vector<64x128xf32>
    %c0_13 = arith.constant 0 : index
    %c0_14 = arith.constant 0 : index
    %14 = vector.load %arg6[%c0_13, %c0_14] : memref<64x1xf32, #tpu.memory_space<vmem>>, vector<64x1xf32>
    %15 = vector.broadcast %14 : vector<64x1xf32> to vector<64x128xf32>
    %16 = arith.addf %13, %15 : vector<64x128xf32>
    %cst_15 = arith.constant 0.000000e+00 : f32
    %17 = vector.broadcast %cst_15 : f32 to vector<64x128xf32>
    %18 = arith.maximumf %16, %17 : vector<64x128xf32>
    %c0_16 = arith.constant 0 : index
    %c0_17 = arith.constant 0 : index
    %19 = vector.load %arg7[%c0_16, %c0_17] : memref<8x64xf32, #tpu.memory_space<vmem>>, vector<8x64xf32>
    %cst_18 = arith.constant dense<0.000000e+00> : vector<8x128xf32>
    %20 = tpu.matmul %19, %18, %cst_18 {dimension_numbers = #tpu.dot_dimension_numbers<[1], [0], [0], [1], [0, 0, 1, 1], [], []>} : vector<8x64xf32>, vector<64x128xf32>, vector<8x128xf32> -> vector<8x128xf32>
    %c0_19 = arith.constant 0 : index
    %c0_20 = arith.constant 0 : index
    %21 = vector.load %arg8[%c0_19, %c0_20] : memref<8x1xf32, #tpu.memory_space<vmem>>, vector<8x1xf32>
    %22 = vector.broadcast %21 : vector<8x1xf32> to vector<8x128xf32>
    %23 = arith.addf %20, %22 : vector<8x128xf32>
    %cst_21 = arith.constant 0.000000e+00 : f32
    %24 = vector.broadcast %cst_21 : f32 to vector<8x128xf32>
    %25 = arith.maximumf %23, %24 : vector<8x128xf32>
    %26 = math.absf %23 : vector<8x128xf32>
    %cst_22 = arith.constant 0.000000e+00 : f32
    %27 = vector.broadcast %cst_22 : f32 to vector<8x128xf32>
    %28 = arith.subf %27, %26 : vector<8x128xf32>
    %29 = math.exp %28 : vector<8x128xf32>
    %30 = math.log1p %29 : vector<8x128xf32>
    %31 = arith.addf %25, %30 : vector<8x128xf32>
    %cst_23 = arith.constant 1.000000e+00 : f32
    %32 = vector.broadcast %cst_23 : f32 to vector<8x128xf32>
    %33 = arith.addf %31, %32 : vector<8x128xf32>
    %c0_24 = arith.constant 0 : index
    %c0_25 = arith.constant 0 : index
    %34 = vector.load %arg9[%c0_24, %c0_25] : memref<8x128xf32, #tpu.memory_space<vmem>>, vector<8x128xf32>
    tpu.vector_store %arg9[%c0_24, %c0_25], %33 {strides = array<i32>} : memref<8x128xf32, #tpu.memory_space<vmem>>, vector<8x128xf32>,
    return
  }
  func.func @transform_0(%arg0: i32) -> (i32, i32) {
    %c0_i32 = arith.constant 0 : i32
    %c0_i32_0 = arith.constant 0 : i32
    return %arg0, %c0_i32 : i32, i32
  }
  func.func @transform_1(%arg0: i32) -> (i32, i32) {
    %c0_i32 = arith.constant 0 : i32
    %c0_i32_0 = arith.constant 0 : i32
    %c0_i32_1 = arith.constant 0 : i32
    return %c0_i32, %c0_i32_0 : i32, i32
  }
  func.func @transform_2(%arg0: i32) -> (i32, i32) {
    %c0_i32 = arith.constant 0 : i32
    %c0_i32_0 = arith.constant 0 : i32
    %c0_i32_1 = arith.constant 0 : i32
    return %c0_i32, %c0_i32_0 : i32, i32
  }
  func.func @transform_3(%arg0: i32) -> (i32, i32) {
    %c0_i32 = arith.constant 0 : i32
    %c0_i32_0 = arith.constant 0 : i32
    %c0_i32_1 = arith.constant 0 : i32
    return %c0_i32, %c0_i32_0 : i32, i32
  }
  func.func @transform_4(%arg0: i32) -> (i32, i32) {
    %c0_i32 = arith.constant 0 : i32
    %c0_i32_0 = arith.constant 0 : i32
    %c0_i32_1 = arith.constant 0 : i32
    return %c0_i32, %c0_i32_0 : i32, i32
  }
  func.func @transform_5(%arg0: i32) -> (i32, i32) {
    %c0_i32 = arith.constant 0 : i32
    %c0_i32_0 = arith.constant 0 : i32
    %c0_i32_1 = arith.constant 0 : i32
    return %c0_i32, %c0_i32_0 : i32, i32
  }
  func.func @transform_6(%arg0: i32) -> (i32, i32) {
    %c0_i32 = arith.constant 0 : i32
    %c0_i32_0 = arith.constant 0 : i32
    %c0_i32_1 = arith.constant 0 : i32
    return %c0_i32, %c0_i32_0 : i32, i32
  }
  func.func @transform_7(%arg0: i32) -> (i32, i32) {
    %c0_i32 = arith.constant 0 : i32
    %c0_i32_0 = arith.constant 0 : i32
    %c0_i32_1 = arith.constant 0 : i32
    return %c0_i32, %c0_i32_0 : i32, i32
  }
  func.func @transform_8(%arg0: i32) -> (i32, i32) {
    %c0_i32 = arith.constant 0 : i32
    %c0_i32_0 = arith.constant 0 : i32
    return %c0_i32, %arg0 : i32, i32
  }
}

</mosaic_0001>

<llo_original>
// kernel: actor_forward.1
$region0: #{actor_forward.1}
  #allocation0 [shape = 'u32[]', space=smem, size = 0x4, offset = 0x4, fixed_abs, tag = 'smem constant byte address 0x4 - core index']
  #allocation1 [shape = 'u32[144,128]{1,0:T(1,128)}', space=vmem, size = 0x12000, scoped, tag = 'internal scratch']
  %s0 = inlined_call_operand.vmem [shape: f32[128,48], index: 0, kind: input, shape index: {}]
  %s1 = inlined_call_operand.vmem [shape: f32[256,48], index: 1, kind: input, shape index: {}]
  %s2 = inlined_call_operand.vmem [shape: f32[128,256], index: 2, kind: input, shape index: {}]
  %s3 = inlined_call_operand.vmem [shape: f32[128,1], index: 3, kind: input, shape index: {}]
  %s4 = inlined_call_operand.vmem [shape: f32[64,128], index: 4, kind: input, shape index: {}]
  %s5 = inlined_call_operand.vmem [shape: f32[64,1], index: 5, kind: input, shape index: {}]
  %s6 = inlined_call_operand.vmem [shape: f32[8,64], index: 6, kind: input, shape index: {}]
  %s7 = inlined_call_operand.vmem [shape: f32[8,1], index: 7, kind: input, shape index: {}]
  %s8 = inlined_call_operand.vmem [shape: f32[8,128], index: 8, kind: output, shape index: {}]
  %s9 = sld [smem:[#allocation0]]
  $region42: #{actor_forward.1} parent=0
    _
  %s11 = ssub.s32 1, %s9
  %s12 = scalar_select 0, %s11, %s9
  // Predicated region
  $region2: #{actor_forward.1} parent=0 // pred_check
    _
  $region3: #{actor_forward.1} parent=0 // pred_check_branch
    %14 = sbr.rel (0) target = $region5
  $region4: #{actor_forward.1} parent=0 // pred_region
    _
  $region5: #{actor_forward.1} parent=0 // pred_fallthru
    _
  // Predicated region
  $region6: #{actor_forward.1} parent=0 // pred_check
    _
  $region7: #{actor_forward.1} parent=0 // pred_check_branch
    %16 = sbr.rel (0) target = $region9
  $region8: #{actor_forward.1} parent=0 // pred_region
    _
  $region9: #{actor_forward.1} parent=0 // pred_fallthru
    _
  // Predicated region
  $region10: #{actor_forward.1} parent=0 // pred_check
    _
  $region11: #{actor_forward.1} parent=0 // pred_check_branch
    %18 = sbr.rel (0) target = $region13
  $region12: #{actor_forward.1} parent=0 // pred_region
    _
  $region13: #{actor_forward.1} parent=0 // pred_fallthru
    _
  // Predicated region
  $region14: #{actor_forward.1} parent=0 // pred_check
    _
  $region15: #{actor_forward.1} parent=0 // pred_check_branch
    %20 = sbr.rel (0) target = $region17
  $region16: #{actor_forward.1} parent=0 // pred_region
    _
  $region17: #{actor_forward.1} parent=0 // pred_fallthru
    _
  // Predicated region
  $region18: #{actor_forward.1} parent=0 // pred_check
    _
  $region19: #{actor_forward.1} parent=0 // pred_check_branch
    %22 = sbr.rel (0) target = $region21
  $region20: #{actor_forward.1} parent=0 // pred_region
    _
  $region21: #{actor_forward.1} parent=0 // pred_fallthru
    _
  // Predicated region
  $region22: #{actor_forward.1} parent=0 // pred_check
    _
  $region23: #{actor_forward.1} parent=0 // pred_check_branch
    %24 = sbr.rel (0) target = $region25
  $region24: #{actor_forward.1} parent=0 // pred_region
    _
  $region25: #{actor_forward.1} parent=0 // pred_fallthru
    _
  // Predicated region
  $region26: #{actor_forward.1} parent=0 // pred_check
    _
  $region27: #{actor_forward.1} parent=0 // pred_check_branch
    %26 = sbr.rel (0) target = $region29
  $region28: #{actor_forward.1} parent=0 // pred_region
    _
  $region29: #{actor_forward.1} parent=0 // pred_fallthru
    _
  // Predicated region
  $region30: #{actor_forward.1} parent=0 // pred_check
    _
  $region31: #{actor_forward.1} parent=0 // pred_check_branch
    %28 = sbr.rel (0) target = $region33
  $region32: #{actor_forward.1} parent=0 // pred_region
    _
  $region33: #{actor_forward.1} parent=0 // pred_fallthru
    _
  %v29 = vld [vmem:[%s0] sm:$0xff]
  %v30 = vld [vmem:[%s0 + $0x8] sm:$0xff]
  %v31 = vld [vmem:[%s0 + $0x10] sm:$0xff]
  %v32 = vld [vmem:[%s0 + $0x18] sm:$0xff]
  %v33 = vld [vmem:[%s0 + $0x20] sm:$0xff]
  %v34 = vld [vmem:[%s0 + $0x28] sm:$0xff]
  %v35 = vld [vmem:[%s0 + $0x30] sm:$0xff]
  %v36 = vld [vmem:[%s0 + $0x38] sm:$0xff]
  %v37 = vld [vmem:[%s0 + $0x40] sm:$0xff]
  %v38 = vld [vmem:[%s0 + $0x48] sm:$0xff]
  %v39 = vld [vmem:[%s0 + $0x50] sm:$0xff]
  %v40 = vld [vmem:[%s0 + $0x58] sm:$0xff]
  %v41 = vld [vmem:[%s0 + $0x60] sm:$0xff]
  %v42 = vld [vmem:[%s0 + $0x68] sm:$0xff]
  %v43 = vld [vmem:[%s0 + $0x70] sm:$0xff]
  %v44 = vld [vmem:[%s0 + $0x78] sm:$0xff]
  %v45 = vld [vmem:[%s1] sm:$0xff]
  %v46 = vld [vmem:[%s1 + $0x8] sm:$0xff]
  %v47 = vld [vmem:[%s1 + $0x10] sm:$0xff]
  %v48 = vld [vmem:[%s1 + $0x18] sm:$0xff]
  %v49 = vld [vmem:[%s1 + $0x20] sm:$0xff]
  %v50 = vld [vmem:[%s1 + $0x28] sm:$0xff]
  %v51 = vld [vmem:[%s1 + $0x30] sm:$0xff]
  %v52 = vld [vmem:[%s1 + $0x38] sm:$0xff]
  %v53 = vld [vmem:[%s1 + $0x40] sm:$0xff]
  %v54 = vld [vmem:[%s1 + $0x48] sm:$0xff]
  %v55 = vld [vmem:[%s1 + $0x50] sm:$0xff]
  %v56 = vld [vmem:[%s1 + $0x58] sm:$0xff]
  %v57 = vld [vmem:[%s1 + $0x60] sm:$0xff]
  %v58 = vld [vmem:[%s1 + $0x68] sm:$0xff]
  %v59 = vld [vmem:[%s1 + $0x70] sm:$0xff]
  %v60 = vld [vmem:[%s1 + $0x78] sm:$0xff]
  %v61 = vld [vmem:[%s1 + $0x80] sm:$0xff]
  %v62 = vld [vmem:[%s1 + $0x88] sm:$0xff]
  %v63 = vld [vmem:[%s1 + $0x90] sm:$0xff]
  %v64 = vld [vmem:[%s1 + $0x98] sm:$0xff]
  %v65 = vld [vmem:[%s1 + $0xa0] sm:$0xff]
  %v66 = vld [vmem:[%s1 + $0xa8] sm:$0xff]
  %v67 = vld [vmem:[%s1 + $0xb0] sm:$0xff]
  %v68 = vld [vmem:[%s1 + $0xb8] sm:$0xff]
  %v69 = vld [vmem:[%s1 + $0xc0] sm:$0xff]
  %v70 = vld [vmem:[%s1 + $0xc8] sm:$0xff]
  %v71 = vld [vmem:[%s1 + $0xd0] sm:$0xff]
  %v72 = vld [vmem:[%s1 + $0xd8] sm:$0xff]
  %v73 = vld [vmem:[%s1 + $0xe0] sm:$0xff]
  %v74 = vld [vmem:[%s1 + $0xe8] sm:$0xff]
  %v75 = vld [vmem:[%s1 + $0xf0] sm:$0xff]
  %v76 = vld [vmem:[%s1 + $0xf8] sm:$0xff]
  %vm77 = vcmask 392192
  %v79 = vsel %vm77, %v45, 0
  %v82 = vsel %vm77, %v46, 0
  %v85 = vsel %vm77, %v47, 0
  %v88 = vsel %vm77, %v48, 0
  %v91 = vsel %vm77, %v49, 0
  %v94 = vsel %vm77, %v50, 0
  %v97 = vsel %vm77, %v51, 0
  %v100 = vsel %vm77, %v52, 0
  %v103 = vsel %vm77, %v53, 0
  %v106 = vsel %vm77, %v54, 0
  %v109 = vsel %vm77, %v55, 0
  %v112 = vsel %vm77, %v56, 0
  %v115 = vsel %vm77, %v57, 0
  %v118 = vsel %vm77, %v58, 0
  %v121 = vsel %vm77, %v59, 0
  %v124 = vsel %vm77, %v60, 0
  %v127 = vsel %vm77, %v61, 0
  %v130 = vsel %vm77, %v62, 0
  %v133 = vsel %vm77, %v63, 0
  %v136 = vsel %vm77, %v64, 0
  %v139 = vsel %vm77, %v65, 0
  %v142 = vsel %vm77, %v66, 0
  %v145 = vsel %vm77, %v67, 0
  %v148 = vsel %vm77, %v68, 0
  %v151 = vsel %vm77, %v69, 0
  %v154 = vsel %vm77, %v70, 0
  %v157 = vsel %vm77, %v71, 0
  %v160 = vsel %vm77, %v72, 0
  %v163 = vsel %vm77, %v73, 0
  %v166 = vsel %vm77, %v74, 0
  %v169 = vsel %vm77, %v75, 0
  %v172 = vsel %vm77, %v76, 0
  %v175 = vsel %vm77, %v29, 0
  %v178 = vsel %vm77, %v30, 0
  %v181 = vsel %vm77, %v31, 0
  %v184 = vsel %vm77, %v32, 0
  %v187 = vsel %vm77, %v33, 0
  %v190 = vsel %vm77, %v34, 0
  %v193 = vsel %vm77, %v35, 0
  %v196 = vsel %vm77, %v36, 0
  %v199 = vsel %vm77, %v37, 0
  %v202 = vsel %vm77, %v38, 0
  %v205 = vsel %vm77, %v39, 0
  %v208 = vsel %vm77, %v40, 0
  %v211 = vsel %vm77, %v41, 0
  %v214 = vsel %vm77, %v42, 0
  %v217 = vsel %vm77, %v43, 0
  %v220 = vsel %vm77, %v44, 0
  %222 = vmatprep.subr.mxu0 0.0
  %223 = vmatpush1.xpose.msra.mxu0 %v175
  %224 = vmatprep.subr.mxu0 0.0
  %225 = vmatpush1.xpose.msra.mxu0 %v178
  %226 = vmatprep.subr.mxu0 0.0
  %227 = vmatpush1.xpose.msra.mxu0 %v181
  %228 = vmatprep.subr.mxu0 0.0
  %229 = vmatpush1.xpose.msra.mxu0 %v184
  %230 = vmatprep.subr.mxu0 0.0
  %231 = vmatpush1.xpose.msra.mxu0 %v187
  %232 = vmatprep.subr.mxu0 0.0
  %233 = vmatpush1.xpose.msra.mxu0 %v190
  %234 = vmatprep.subr.mxu0 0.0
  %235 = vmatpush1.xpose.msra.mxu0 %v193
  %236 = vmatprep.subr.mxu0 0.0
  %237 = vmatpush1.xpose.msra.mxu0 %v196
  %238 = vmatprep.subr.mxu0 0.0
  %239 = vmatpush1.xpose.msra.mxu0 %v199
  %240 = vmatprep.subr.mxu0 0.0
  %241 = vmatpush1.xpose.msra.mxu0 %v202
  %242 = vmatprep.subr.mxu0 0.0
  %243 = vmatpush1.xpose.msra.mxu0 %v205
  %244 = vmatprep.subr.mxu0 0.0
  %245 = vmatpush1.xpose.msra.mxu0 %v208
  %246 = vmatprep.subr.mxu0 0.0
  %247 = vmatpush1.xpose.msra.mxu0 %v211
  %248 = vmatprep.subr.mxu0 0.0
  %249 = vmatpush1.xpose.msra.mxu0 %v214
  %250 = vmatprep.subr.mxu0 0.0
  %251 = vmatpush1.xpose.msra.mxu0 %v217
  %252 = vmatprep.subr.mxu0 0.0
  %253 = vmatpush1.xpose.msra.mxu0 %v220
  %254 = vmatprep.subr.mxu0 0.0
  %255 = vmatpush1.xpose.msra.mxu0 0.0
  %256 = vmatprep.subr.mxu0 0.0
  %257 = vmatpush1.xpose.msra.mxu0 0.0
  %258 = vmatprep.subr.mxu0 0.0
  %259 = vmatpush1.xpose.msra.mxu0 0.0
  %260 = vmatprep.subr.mxu0 0.0
  %261 = vmatpush1.xpose.msra.mxu0 0.0
  %262 = vmatprep.subr.mxu0 0.0
  %263 = vmatpush1.xpose.msra.mxu0 0.0
  %264 = vmatprep.subr.mxu0 0.0
  %265 = vmatpush1.xpose.msra.mxu0 0.0
  %266 = vmatprep.subr.mxu0 0.0
  %267 = vmatpush1.xpose.msra.mxu0 0.0
  %268 = vmatprep.subr.mxu0 0.0
  %269 = vmatpush1.xpose.msra.mxu0 0.0
  %270 = vmatprep.subr.mxu0 0.0
  %271 = vmatpush1.xpose.msra.mxu0 0.0
  %272 = vmatprep.subr.mxu0 0.0
  %273 = vmatpush1.xpose.msra.mxu0 0.0
  %274 = vmatprep.subr.mxu0 0.0
  %275 = vmatpush1.xpose.msra.mxu0 0.0
  %276 = vmatprep.subr.mxu0 0.0
  %277 = vmatpush1.xpose.msra.mxu0 0.0
  %278 = vmatprep.subr.mxu0 0.0
  %279 = vmatpush1.xpose.msra.mxu0 0.0
  %280 = vmatprep.subr.mxu0 0.0
  %281 = vmatpush1.xpose.msra.mxu0 0.0
  %282 = vmatprep.subr.mxu0 0.0
  %283 = vmatpush1.xpose.msra.mxu0 0.0
  %284 = vmatprep.subr.mxu0 0.0
  %285 = vmatpush1.xpose.msra.mxu0 0.0
  %286 = vmatprep.mubr.f32.mxu0 0.0
  %287 = vmatmul.mubr.f32.gmra.mrb[0].mxu0 %v79
  %v288 = vpop.f32.mrb[0].mxu0
  %v289 = vadd.f32 0.0, %v288
  %v290 = vpop.f32.mrb[0].mxu0
  %291 = vmatprep.mubr.f32.mxu0 0.0
  %292 = vmatmul.mubr.f32.gmra.mrb[0].mxu0 %v82
  %v293 = vpop.f32.mrb[0].mxu0
  %v294 = vadd.f32 0.0, %v293
  %v295 = vpop.f32.mrb[0].mxu0
  %296 = vmatprep.mubr.f32.mxu0 0.0
  %297 = vmatmul.mubr.f32.gmra.mrb[0].mxu0 %v85
  %v298 = vpop.f32.mrb[0].mxu0
  %v299 = vadd.f32 0.0, %v298
  %v300 = vpop.f32.mrb[0].mxu0
  %301 = vmatprep.mubr.f32.mxu0 0.0
  %302 = vmatmul.mubr.f32.gmra.mrb[0].mxu0 %v88
  %v303 = vpop.f32.mrb[0].mxu0
  %v304 = vadd.f32 0.0, %v303
  %v305 = vpop.f32.mrb[0].mxu0
  %306 = vmatprep.mubr.f32.mxu0 0.0
  %307 = vmatmul.mubr.f32.gmra.mrb[0].mxu0 %v91
  %v308 = vpop.f32.mrb[0].mxu0
  %v309 = vadd.f32 0.0, %v308
  %v310 = vpop.f32.mrb[0].mxu0
  %311 = vmatprep.mubr.f32.mxu0 0.0
  %312 = vmatmul.mubr.f32.gmra.mrb[0].mxu0 %v94
  %v313 = vpop.f32.mrb[0].mxu0
  %v314 = vadd.f32 0.0, %v313
  %v315 = vpop.f32.mrb[0].mxu0
  %316 = vmatprep.mubr.f32.mxu0 0.0
  %317 = vmatmul.mubr.f32.gmra.mrb[0].mxu0 %v97
  %v318 = vpop.f32.mrb[0].mxu0
  %v319 = vadd.f32 0.0, %v318
  %v320 = vpop.f32.mrb[0].mxu0
  %321 = vmatprep.mubr.f32.mxu0 0.0
  %322 = vmatmul.mubr.f32.gmra.mrb[0].mxu0 %v100
  %v323 = vpop.f32.mrb[0].mxu0
  %v324 = vadd.f32 0.0, %v323
  %v325 = vpop.f32.mrb[0].mxu0
  %326 = vmatprep.mubr.f32.mxu0 0.0
  %327 = vmatmul.mubr.f32.gmra.mrb[0].mxu0 %v103
  %v328 = vpop.f32.mrb[0].mxu0
  %v329 = vadd.f32 0.0, %v328
  %v330 = vpop.f32.mrb[0].mxu0
  %331 = vmatprep.mubr.f32.mxu0 0.0
  %332 = vmatmul.mubr.f32.gmra.mrb[0].mxu0 %v106
  %v333 = vpop.f32.mrb[0].mxu0
  %v334 = vadd.f32 0.0, %v333
  %v335 = vpop.f32.mrb[0].mxu0
  %336 = vmatprep.mubr.f32.mxu0 0.0
  %337 = vmatmul.mubr.f32.gmra.mrb[0].mxu0 %v109
  %v338 = vpop.f32.mrb[0].mxu0
  %v339 = vadd.f32 0.0, %v338
  %v340 = vpop.f32.mrb[0].mxu0
  %341 = vmatprep.mubr.f32.mxu0 0.0
  %342 = vmatmul.mubr.f32.gmra.mrb[0].mxu0 %v112
  %v343 = vpop.f32.mrb[0].mxu0
  %v344 = vadd.f32 0.0, %v343
  %v345 = vpop.f32.mrb[0].mxu0
  %346 = vmatprep.mubr.f32.mxu0 0.0
  %347 = vmatmul.mubr.f32.gmra.mrb[0].mxu0 %v115
  %v348 = vpop.f32.mrb[0].mxu0
  %v349 = vadd.f32 0.0, %v348
  %v350 = vpop.f32.mrb[0].mxu0
  %351 = vmatprep.mubr.f32.mxu0 0.0
  %352 = vmatmul.mubr.f32.gmra.mrb[0].mxu0 %v118
  %v353 = vpop.f32.mrb[0].mxu0
  %v354 = vadd.f32 0.0, %v353
  %v355 = vpop.f32.mrb[0].mxu0
  %356 = vmatprep.mubr.f32.mxu0 0.0
  %357 = vmatmul.mubr.f32.gmra.mrb[0].mxu0 %v121
  %v358 = vpop.f32.mrb[0].mxu0
  %v359 = vadd.f32 0.0, %v358
  %v360 = vpop.f32.mrb[0].mxu0
  %361 = vmatprep.mubr.f32.mxu0 0.0
  %362 = vmatmul.mubr.f32.gmra.mrb[0].mxu0 %v124
  %v363 = vpop.f32.mrb[0].mxu0
  %v364 = vadd.f32 0.0, %v363
  %v365 = vpop.f32.mrb[0].mxu0
  %366 = vmatprep.mubr.f32.mxu0 0.0
  %367 = vmatmul.mubr.f32.gmra.mrb[0].mxu0 %v127
  %v368 = vpop.f32.mrb[0].mxu0
  %v369 = vadd.f32 0.0, %v368
  %v370 = vpop.f32.mrb[0].mxu0
  %371 = vmatprep.mubr.f32.mxu0 0.0
  %372 = vmatmul.mubr.f32.gmra.mrb[0].mxu0 %v130
  %v373 = vpop.f32.mrb[0].mxu0
  %v374 = vadd.f32 0.0, %v373
  %v375 = vpop.f32.mrb[0].mxu0
  %376 = vmatprep.mubr.f32.mxu0 0.0
  %377 = vmatmul.mubr.f32.gmra.mrb[0].mxu0 %v133
  %v378 = vpop.f32.mrb[0].mxu0
  %v379 = vadd.f32 0.0, %v378
  %v380 = vpop.f32.mrb[0].mxu0
  %381 = vmatprep.mubr.f32.mxu0 0.0
  %382 = vmatmul.mubr.f32.gmra.mrb[0].mxu0 %v136
  %v383 = vpop.f32.mrb[0].mxu0
  %v384 = vadd.f32 0.0, %v383
  %v385 = vpop.f32.mrb[0].mxu0
  %386 = vmatprep.mubr.f32.mxu0 0.0
  %387 = vmatmul.mubr.f32.gmra.mrb[0].mxu0 %v139
  %v388 = vpop.f32.mrb[0].mxu0
  %v389 = vadd.f32 0.0, %v388
  %v390 = vpop.f32.mrb[0].mxu0
  %391 = vmatprep.mubr.f32.mxu0 0.0
  %392 = vmatmul.mubr.f32.gmra.mrb[0].mxu0 %v142
  %v393 = vpop.f32.mrb[0].mxu0
  %v394 = vadd.f32 0.0, %v393
  %v395 = vpop.f32.mrb[0].mxu0
  %396 = vmatprep.mubr.f32.mxu0 0.0
  %397 = vmatmul.mubr.f32.gmra.mrb[0].mxu0 %v145
  %v398 = vpop.f32.mrb[0].mxu0
  %v399 = vadd.f32 0.0, %v398
  %v400 = vpop.f32.mrb[0].mxu0
  %401 = vmatprep.mubr.f32.mxu0 0.0
  %402 = vmatmul.mubr.f32.gmra.mrb[0].mxu0 %v148
  %v403 = vpop.f32.mrb[0].mxu0
  %v404 = vadd.f32 0.0, %v403
  %v405 = vpop.f32.mrb[0].mxu0
  %406 = vmatprep.mubr.f32.mxu0 0.0
  %407 = vmatmul.mubr.f32.gmra.mrb[0].mxu0 %v151
  %v408 = vpop.f32.mrb[0].mxu0
  %v409 = vadd.f32 0.0, %v408
  %v410 = vpop.f32.mrb[0].mxu0
  %411 = vmatprep.mubr.f32.mxu0 0.0
  %412 = vmatmul.mubr.f32.gmra.mrb[0].mxu0 %v154
  %v413 = vpop.f32.mrb[0].mxu0
  %v414 = vadd.f32 0.0, %v413
  %v415 = vpop.f32.mrb[0].mxu0
  %416 = vmatprep.mubr.f32.mxu0 0.0
  %417 = vmatmul.mubr.f32.gmra.mrb[0].mxu0 %v157
  %v418 = vpop.f32.mrb[0].mxu0
  %v419 = vadd.f32 0.0, %v418
  %v420 = vpop.f32.mrb[0].mxu0
  %421 = vmatprep.mubr.f32.mxu0 0.0
  %422 = vmatmul.mubr.f32.gmra.mrb[0].mxu0 %v160
  %v423 = vpop.f32.mrb[0].mxu0
  %v424 = vadd.f32 0.0, %v423
  %v425 = vpop.f32.mrb[0].mxu0
  %426 = vmatprep.mubr.f32.mxu0 0.0
  %427 = vmatmul.mubr.f32.gmra.mrb[0].mxu0 %v163
  %v428 = vpop.f32.mrb[0].mxu0
  %v429 = vadd.f32 0.0, %v428
  %v430 = vpop.f32.mrb[0].mxu0
  %431 = vmatprep.mubr.f32.mxu0 0.0
  %432 = vmatmul.mubr.f32.gmra.mrb[0].mxu0 %v166
  %v433 = vpop.f32.mrb[0].mxu0
  %v434 = vadd.f32 0.0, %v433
  %v435 = vpop.f32.mrb[0].mxu0
  %436 = vmatprep.mubr.f32.mxu0 0.0
  %437 = vmatmul.mubr.f32.gmra.mrb[0].mxu0 %v169
  %v438 = vpop.f32.mrb[0].mxu0
  %v439 = vadd.f32 0.0, %v438
  %v440 = vpop.f32.mrb[0].mxu0
  %441 = vmatprep.mubr.f32.mxu0 0.0
  %442 = vmatmul.mubr.f32.gmra.mrb[0].mxu0 %v172
  %v443 = vpop.f32.mrb[0].mxu0
  %v444 = vadd.f32 0.0, %v443
  %v445 = vpop.f32.mrb[0].mxu0
  %446 = vdwg.mxu0
  %v447 = vmax.f32 %v289, 0.0
  %v448 = vmax.f32 %v294, 0.0
  %v449 = vmax.f32 %v299, 0.0
  %v450 = vmax.f32 %v304, 0.0
  %v451 = vmax.f32 %v309, 0.0
  %v452 = vmax.f32 %v314, 0.0
  %v453 = vmax.f32 %v319, 0.0
  %v454 = vmax.f32 %v324, 0.0
  %v455 = vmax.f32 %v329, 0.0
  %v456 = vmax.f32 %v334, 0.0
  %v457 = vmax.f32 %v339, 0.0
  %v458 = vmax.f32 %v344, 0.0
  %v459 = vmax.f32 %v349, 0.0
  %v460 = vmax.f32 %v354, 0.0
  %v461 = vmax.f32 %v359, 0.0
  %v462 = vmax.f32 %v364, 0.0
  %v463 = vmax.f32 %v369, 0.0
  %v464 = vmax.f32 %v374, 0.0
  %v465 = vmax.f32 %v379, 0.0
  %v466 = vmax.f32 %v384, 0.0
  %v467 = vmax.f32 %v389, 0.0
  %v468 = vmax.f32 %v394, 0.0
  %v469 = vmax.f32 %v399, 0.0
  %v470 = vmax.f32 %v404, 0.0
  %v471 = vmax.f32 %v409, 0.0
  %v472 = vmax.f32 %v414, 0.0
  %v473 = vmax.f32 %v419, 0.0
  %v474 = vmax.f32 %v424, 0.0
  %v475 = vmax.f32 %v429, 0.0
  %v476 = vmax.f32 %v434, 0.0
  %v477 = vmax.f32 %v439, 0.0
  %v478 = vmax.f32 %v444, 0.0
  %v479 = vld [vmem:[%s2] sm:$0xff]
  %v480 = vld [vmem:[%s2 + $0x8] sm:$0xff]
  %v481 = vld [vmem:[%s2 + $0x10] sm:$0xff]
  %v482 = vld [vmem:[%s2 + $0x18] sm:$0xff]
  %v483 = vld [vmem:[%s2 + $0x20] sm:$0xff]
  %v484 = vld [vmem:[%s2 + $0x28] sm:$0xff]
  %v485 = vld [vmem:[%s2 + $0x30] sm:$0xff]
  %v486 = vld [vmem:[%s2 + $0x38] sm:$0xff]
  %v487 = vld [vmem:[%s2 + $0x40] sm:$0xff]
  %v488 = vld [vmem:[%s2 + $0x48] sm:$0xff]
  %v489 = vld [vmem:[%s2 + $0x50] sm:$0xff]
  %v490 = vld [vmem:[%s2 + $0x58] sm:$0xff]
  %v491 = vld [vmem:[%s2 + $0x60] sm:$0xff]
  %v492 = vld [vmem:[%s2 + $0x68] sm:$0xff]
  %v493 = vld [vmem:[%s2 + $0x70] sm:$0xff]
  %v494 = vld [vmem:[%s2 + $0x78] sm:$0xff]
  %v495 = vld [vmem:[%s2 + $0x80] sm:$0xff]
  %v496 = vld [vmem:[%s2 + $0x88] sm:$0xff]
  %v497 = vld [vmem:[%s2 + $0x90] sm:$0xff]
  %v498 = vld [vmem:[%s2 + $0x98] sm:$0xff]
  %v499 = vld [vmem:[%s2 + $0xa0] sm:$0xff]
  %v500 = vld [vmem:[%s2 + $0xa8] sm:$0xff]
  %v501 = vld [vmem:[%s2 + $0xb0] sm:$0xff]
  %v502 = vld [vmem:[%s2 + $0xb8] sm:$0xff]
  %v503 = vld [vmem:[%s2 + $0xc0] sm:$0xff]
  %v504 = vld [vmem:[%s2 + $0xc8] sm:$0xff]
  %v505 = vld [vmem:[%s2 + $0xd0] sm:$0xff]
  %v506 = vld [vmem:[%s2 + $0xd8] sm:$0xff]
  %v507 = vld [vmem:[%s2 + $0xe0] sm:$0xff]
  %v508 = vld [vmem:[%s2 + $0xe8] sm:$0xff]
  %v509 = vld [vmem:[%s2 + $0xf0] sm:$0xff]
  %v510 = vld [vmem:[%s2 + $0xf8] sm:$0xff]
  %v511 = vld [vmem:[%s3] sm:$0xff]
  %v512 = vld [vmem:[%s3 + $0x8] sm:$0xff]
  %v513 = vld [vmem:[%s3 + $0x10] sm:$0xff]
  %v514 = vld [vmem:[%s3 + $0x18] sm:$0xff]
  %v515 = vld [vmem:[%s3 + $0x20] sm:$0xff]
  %v516 = vld [vmem:[%s3 + $0x28] sm:$0xff]
  %v517 = vld [vmem:[%s3 + $0x30] sm:$0xff]
  %v518 = vld [vmem:[%s3 + $0x38] sm:$0xff]
  %v519 = vld [vmem:[%s3 + $0x40] sm:$0xff]
  %v520 = vld [vmem:[%s3 + $0x48] sm:$0xff]
  %v521 = vld [vmem:[%s3 + $0x50] sm:$0xff]
  %v522 = vld [vmem:[%s3 + $0x58] sm:$0xff]
  %v523 = vld [vmem:[%s3 + $0x60] sm:$0xff]
  %v524 = vld [vmem:[%s3 + $0x68] sm:$0xff]
  %v525 = vld [vmem:[%s3 + $0x70] sm:$0xff]
  %v526 = vld [vmem:[%s3 + $0x78] sm:$0xff]
  %528 = vset.pattern.permute.xlu0 0
  %529 = vperm.xlu0 %528, %v511
  %v530 = vpop.permute.xlu0 %529
  %533 = vset.pattern.permute.xlu0 0
  %534 = vperm.xlu0 %533, %v512
  %v535 = vpop.permute.xlu0 %534
  %538 = vset.pattern.permute.xlu0 0
  %539 = vperm.xlu0 %538, %v513
  %v540 = vpop.permute.xlu0 %539
  %543 = vset.pattern.permute.xlu0 0
  %544 = vperm.xlu0 %543, %v514
  %v545 = vpop.permute.xlu0 %544
  %548 = vset.pattern.permute.xlu0 0
  %549 = vperm.xlu0 %548, %v515
  %v550 = vpop.permute.xlu0 %549
  %553 = vset.pattern.permute.xlu0 0
  %554 = vperm.xlu0 %553, %v516
  %v555 = vpop.permute.xlu0 %554
  %558 = vset.pattern.permute.xlu0 0
  %559 = vperm.xlu0 %558, %v517
  %v560 = vpop.permute.xlu0 %559
  %563 = vset.pattern.permute.xlu0 0
  %564 = vperm.xlu0 %563, %v518
  %v565 = vpop.permute.xlu0 %564
  %568 = vset.pattern.permute.xlu0 0
  %569 = vperm.xlu0 %568, %v519
  %v570 = vpop.permute.xlu0 %569
  %573 = vset.pattern.permute.xlu0 0
  %574 = vperm.xlu0 %573, %v520
  %v575 = vpop.permute.xlu0 %574
  %578 = vset.pattern.permute.xlu0 0
  %579 = vperm.xlu0 %578, %v521
  %v580 = vpop.permute.xlu0 %579
  %583 = vset.pattern.permute.xlu0 0
  %584 = vperm.xlu0 %583, %v522
  %v585 = vpop.permute.xlu0 %584
  %588 = vset.pattern.permute.xlu0 0
  %589 = vperm.xlu0 %588, %v523
  %v590 = vpop.permute.xlu0 %589
  %593 = vset.pattern.permute.xlu0 0
  %594 = vperm.xlu0 %593, %v524
  %v595 = vpop.permute.xlu0 %594
  %598 = vset.pattern.permute.xlu0 0
  %599 = vperm.xlu0 %598, %v525
  %v600 = vpop.permute.xlu0 %599
  %603 = vset.pattern.permute.xlu0 0
  %604 = vperm.xlu0 %603, %v526
  %v605 = vpop.permute.xlu0 %604
  %607 = vmatprep.subr.mxu0 0.0
  %608 = vmatpush1.msra.mxu0 %v447
  %609 = vmatprep.subr.mxu0 0.0
  %610 = vmatpush1.msra.mxu0 %v448
  %611 = vmatprep.subr.mxu0 0.0
  %612 = vmatpush1.msra.mxu0 %v449
  %613 = vmatprep.subr.mxu0 0.0
  %614 = vmatpush1.msra.mxu0 %v450
  %615 = vmatprep.subr.mxu0 0.0
  %616 = vmatpush1.msra.mxu0 %v451
  %617 = vmatprep.subr.mxu0 0.0
  %618 = vmatpush1.msra.mxu0 %v452
  %619 = vmatprep.subr.mxu0 0.0
  %620 = vmatpush1.msra.mxu0 %v453
  %621 = vmatprep.subr.mxu0 0.0
  %622 = vmatpush1.msra.mxu0 %v454
  %623 = vmatprep.subr.mxu0 0.0
  %624 = vmatpush1.msra.mxu0 %v455
  %625 = vmatprep.subr.mxu0 0.0
  %626 = vmatpush1.msra.mxu0 %v456
  %627 = vmatprep.subr.mxu0 0.0
  %628 = vmatpush1.msra.mxu0 %v457
  %629 = vmatprep.subr.mxu0 0.0
  %630 = vmatpush1.msra.mxu0 %v458
  %631 = vmatprep.subr.mxu0 0.0
  %632 = vmatpush1.msra.mxu0 %v459
  %633 = vmatprep.subr.mxu0 0.0
  %634 = vmatpush1.msra.mxu0 %v460
  %635 = vmatprep.subr.mxu0 0.0
  %636 = vmatpush1.msra.mxu0 %v461
  %637 = vmatprep.subr.mxu0 0.0
  %638 = vmatpush1.msra.mxu0 %v462
  %639 = vmatprep.subr.mxu0 0.0
  %640 = vmatpush1.msra.mxu0 %v463
  %641 = vmatprep.subr.mxu0 0.0
  %642 = vmatpush1.msra.mxu0 %v464
  %643 = vmatprep.subr.mxu0 0.0
  %644 = vmatpush1.msra.mxu0 %v465
  %645 = vmatprep.subr.mxu0 0.0
  %646 = vmatpush1.msra.mxu0 %v466
  %647 = vmatprep.subr.mxu0 0.0
  %648 = vmatpush1.msra.mxu0 %v467
  %649 = vmatprep.subr.mxu0 0.0
  %650 = vmatpush1.msra.mxu0 %v468
  %651 = vmatprep.subr.mxu0 0.0
  %652 = vmatpush1.msra.mxu0 %v469
  %653 = vmatprep.subr.mxu0 0.0
  %654 = vmatpush1.msra.mxu0 %v470
  %655 = vmatprep.subr.mxu0 0.0
  %656 = vmatpush1.msra.mxu0 %v471
  %657 = vmatprep.subr.mxu0 0.0
  %658 = vmatpush1.msra.mxu0 %v472
  %659 = vmatprep.subr.mxu0 0.0
  %660 = vmatpush1.msra.mxu0 %v473
  %661 = vmatprep.subr.mxu0 0.0
  %662 = vmatpush1.msra.mxu0 %v474
  %663 = vmatprep.subr.mxu0 0.0
  %664 = vmatpush1.msra.mxu0 %v475
  %665 = vmatprep.subr.mxu0 0.0
  %666 = vmatpush1.msra.mxu0 %v476
  %667 = vmatprep.subr.mxu0 0.0
  %668 = vmatpush1.msra.mxu0 %v477
  %669 = vmatprep.subr.mxu0 0.0
  %670 = vmatpush1.msra.mxu0 %v478
  %671 = vmatprep.mubr.f32.mxu0 %v480
  %672 = vmatmul.mubr.f32.gmra.mrb[0].mxu0 %v479
  %v673 = vpop.f32.mrb[0].mxu0
  %v674 = vadd.f32 %v530, %v673
  %v675 = vpop.f32.mrb[0].mxu0
  %676 = vmatprep.mubr.f32.mxu0 %v482
  %677 = vmatmul.mubr.f32.gmra.mrb[0].mxu0 %v481
  %v678 = vpop.f32.mrb[0].mxu0
  %v679 = vadd.f32 %v535, %v678
  %v680 = vpop.f32.mrb[0].mxu0
  %681 = vmatprep.mubr.f32.mxu0 %v484
  %682 = vmatmul.mubr.f32.gmra.mrb[0].mxu0 %v483
  %v683 = vpop.f32.mrb[0].mxu0
  %v684 = vadd.f32 %v540, %v683
  %v685 = vpop.f32.mrb[0].mxu0
  %686 = vmatprep.mubr.f32.mxu0 %v486
  %687 = vmatmul.mubr.f32.gmra.mrb[0].mxu0 %v485
  %v688 = vpop.f32.mrb[0].mxu0
  %v689 = vadd.f32 %v545, %v688
  %v690 = vpop.f32.mrb[0].mxu0
  %691 = vmatprep.mubr.f32.mxu0 %v488
  %692 = vmatmul.mubr.f32.gmra.mrb[0].mxu0 %v487
  %v693 = vpop.f32.mrb[0].mxu0
  %v694 = vadd.f32 %v550, %v693
  %v695 = vpop.f32.mrb[0].mxu0
  %696 = vmatprep.mubr.f32.mxu0 %v490
  %697 = vmatmul.mubr.f32.gmra.mrb[0].mxu0 %v489
  %v698 = vpop.f32.mrb[0].mxu0
  %v699 = vadd.f32 %v555, %v698
  %v700 = vpop.f32.mrb[0].mxu0
  %701 = vmatprep.mubr.f32.mxu0 %v492
  %702 = vmatmul.mubr.f32.gmra.mrb[0].mxu0 %v491
  %v703 = vpop.f32.mrb[0].mxu0
  %v704 = vadd.f32 %v560, %v703
  %v705 = vpop.f32.mrb[0].mxu0
  %706 = vmatprep.mubr.f32.mxu0 %v494
  %707 = vmatmul.mubr.f32.gmra.mrb[0].mxu0 %v493
  %v708 = vpop.f32.mrb[0].mxu0
  %v709 = vadd.f32 %v565, %v708
  %v710 = vpop.f32.mrb[0].mxu0
  %711 = vmatprep.mubr.f32.mxu0 %v496
  %712 = vmatmul.mubr.f32.gmra.mrb[0].mxu0 %v495
  %v713 = vpop.f32.mrb[0].mxu0
  %v714 = vadd.f32 %v570, %v713
  %v715 = vpop.f32.mrb[0].mxu0
  %716 = vmatprep.mubr.f32.mxu0 %v498
  %717 = vmatmul.mubr.f32.gmra.mrb[0].mxu0 %v497
  %v718 = vpop.f32.mrb[0].mxu0
  %v719 = vadd.f32 %v575, %v718
  %v720 = vpop.f32.mrb[0].mxu0
  %721 = vmatprep.mubr.f32.mxu0 %v500
  %722 = vmatmul.mubr.f32.gmra.mrb[0].mxu0 %v499
  %v723 = vpop.f32.mrb[0].mxu0
  %v724 = vadd.f32 %v580, %v723
  %v725 = vpop.f32.mrb[0].mxu0
  %726 = vmatprep.mubr.f32.mxu0 %v502
  %727 = vmatmul.mubr.f32.gmra.mrb[0].mxu0 %v501
  %v728 = vpop.f32.mrb[0].mxu0
  %v729 = vadd.f32 %v585, %v728
  %v730 = vpop.f32.mrb[0].mxu0
  %731 = vmatprep.mubr.f32.mxu0 %v504
  %732 = vmatmul.mubr.f32.gmra.mrb[0].mxu0 %v503
  %v733 = vpop.f32.mrb[0].mxu0
  %v734 = vadd.f32 %v590, %v733
  %v735 = vpop.f32.mrb[0].mxu0
  %736 = vmatprep.mubr.f32.mxu0 %v506
  %737 = vmatmul.mubr.f32.gmra.mrb[0].mxu0 %v505
  %v738 = vpop.f32.mrb[0].mxu0
  %v739 = vadd.f32 %v595, %v738
  %v740 = vpop.f32.mrb[0].mxu0
  %741 = vmatprep.mubr.f32.mxu0 %v508
  %742 = vmatmul.mubr.f32.gmra.mrb[0].mxu0 %v507
  %v743 = vpop.f32.mrb[0].mxu0
  %v744 = vadd.f32 %v600, %v743
  %v745 = vpop.f32.mrb[0].mxu0
  %746 = vmatprep.mubr.f32.mxu0 %v510
  %747 = vmatmul.mubr.f32.gmra.mrb[0].mxu0 %v509
  %v748 = vpop.f32.mrb[0].mxu0
  %v749 = vadd.f32 %v605, %v748
  %v750 = vpop.f32.mrb[0].mxu0
  %751 = vdwg.mxu0
  %v752 = vmax.f32 %v674, 0.0
  %v753 = vmax.f32 %v679, 0.0
  %v754 = vmax.f32 %v684, 0.0
  %v755 = vmax.f32 %v689, 0.0
  %v756 = vmax.f32 %v694, 0.0
  %v757 = vmax.f32 %v699, 0.0
  %v758 = vmax.f32 %v704, 0.0
  %v759 = vmax.f32 %v709, 0.0
  %v760 = vmax.f32 %v714, 0.0
  %v761 = vmax.f32 %v719, 0.0
  %v762 = vmax.f32 %v724, 0.0
  %v763 = vmax.f32 %v729, 0.0
  %v764 = vmax.f32 %v734, 0.0
  %v765 = vmax.f32 %v739, 0.0
  %v766 = vmax.f32 %v744, 0.0
  %v767 = vmax.f32 %v749, 0.0
  %v768 = vld [vmem:[%s4] sm:$0xff]
  %v769 = vld [vmem:[%s4 + $0x8] sm:$0xff]
  %v770 = vld [vmem:[%s4 + $0x10] sm:$0xff]
  %v771 = vld [vmem:[%s4 + $0x18] sm:$0xff]
  %v772 = vld [vmem:[%s4 + $0x20] sm:$0xff]
  %v773 = vld [vmem:[%s4 + $0x28] sm:$0xff]
  %v774 = vld [vmem:[%s4 + $0x30] sm:$0xff]
  %v775 = vld [vmem:[%s4 + $0x38] sm:$0xff]
  %v776 = vld [vmem:[%s5] sm:$0xff]
  %v777 = vld [vmem:[%s5 + $0x8] sm:$0xff]
  %v778 = vld [vmem:[%s5 + $0x10] sm:$0xff]
  %v779 = vld [vmem:[%s5 + $0x18] sm:$0xff]
  %v780 = vld [vmem:[%s5 + $0x20] sm:$0xff]
  %v781 = vld [vmem:[%s5 + $0x28] sm:$0xff]
  %v782 = vld [vmem:[%s5 + $0x30] sm:$0xff]
  %v783 = vld [vmem:[%s5 + $0x38] sm:$0xff]
  %785 = vset.pattern.permute.xlu0 0
  %786 = vperm.xlu0 %785, %v776
  %v787 = vpop.permute.xlu0 %786
  %790 = vset.pattern.permute.xlu0 0
  %791 = vperm.xlu0 %790, %v777
  %v792 = vpop.permute.xlu0 %791
  %795 = vset.pattern.permute.xlu0 0
  %796 = vperm.xlu0 %795, %v778
  %v797 = vpop.permute.xlu0 %796
  %800 = vset.pattern.permute.xlu0 0
  %801 = vperm.xlu0 %800, %v779
  %v802 = vpop.permute.xlu0 %801
  %805 = vset.pattern.permute.xlu0 0
  %806 = vperm.xlu0 %805, %v780
  %v807 = vpop.permute.xlu0 %806
  %810 = vset.pattern.permute.xlu0 0
  %811 = vperm.xlu0 %810, %v781
  %v812 = vpop.permute.xlu0 %811
  %815 = vset.pattern.permute.xlu0 0
  %816 = vperm.xlu0 %815, %v782
  %v817 = vpop.permute.xlu0 %816
  %820 = vset.pattern.permute.xlu0 0
  %821 = vperm.xlu0 %820, %v783
  %v822 = vpop.permute.xlu0 %821
  %824 = vmatprep.subr.mxu0 0.0
  %825 = vmatpush1.msra.mxu0 %v752
  %826 = vmatprep.subr.mxu0 0.0
  %827 = vmatpush1.msra.mxu0 %v753
  %828 = vmatprep.subr.mxu0 0.0
  %829 = vmatpush1.msra.mxu0 %v754
  %830 = vmatprep.subr.mxu0 0.0
  %831 = vmatpush1.msra.mxu0 %v755
  %832 = vmatprep.subr.mxu0 0.0
  %833 = vmatpush1.msra.mxu0 %v756
  %834 = vmatprep.subr.mxu0 0.0
  %835 = vmatpush1.msra.mxu0 %v757
  %836 = vmatprep.subr.mxu0 0.0
  %837 = vmatpush1.msra.mxu0 %v758
  %838 = vmatprep.subr.mxu0 0.0
  %839 = vmatpush1.msra.mxu0 %v759
  %840 = vmatprep.subr.mxu0 0.0
  %841 = vmatpush1.msra.mxu0 %v760
  %842 = vmatprep.subr.mxu0 0.0
  %843 = vmatpush1.msra.mxu0 %v761
  %844 = vmatprep.subr.mxu0 0.0
  %845 = vmatpush1.msra.mxu0 %v762
  %846 = vmatprep.subr.mxu0 0.0
  %847 = vmatpush1.msra.mxu0 %v763
  %848 = vmatprep.subr.mxu0 0.0
  %849 = vmatpush1.msra.mxu0 %v764
  %850 = vmatprep.subr.mxu0 0.0
  %851 = vmatpush1.msra.mxu0 %v765
  %852 = vmatprep.subr.mxu0 0.0
  %853 = vmatpush1.msra.mxu0 %v766
  %854 = vmatprep.subr.mxu0 0.0
  %855 = vmatpush1.msra.mxu0 %v767
  %856 = vmatprep.subr.mxu0 0.0
  %857 = vmatpush1.msra.mxu0 0.0
  %858 = vmatprep.subr.mxu0 0.0
  %859 = vmatpush1.msra.mxu0 0.0
  %860 = vmatprep.subr.mxu0 0.0
  %861 = vmatpush1.msra.mxu0 0.0
  %862 = vmatprep.subr.mxu0 0.0
  %863 = vmatpush1.msra.mxu0 0.0
  %864 = vmatprep.subr.mxu0 0.0
  %865 = vmatpush1.msra.mxu0 0.0
  %866 = vmatprep.subr.mxu0 0.0
  %867 = vmatpush1.msra.mxu0 0.0
  %868 = vmatprep.subr.mxu0 0.0
  %869 = vmatpush1.msra.mxu0 0.0
  %870 = vmatprep.subr.mxu0 0.0
  %871 = vmatpush1.msra.mxu0 0.0
  %872 = vmatprep.subr.mxu0 0.0
  %873 = vmatpush1.msra.mxu0 0.0
  %874 = vmatprep.subr.mxu0 0.0
  %875 = vmatpush1.msra.mxu0 0.0
  %876 = vmatprep.subr.mxu0 0.0
  %877 = vmatpush1.msra.mxu0 0.0
  %878 = vmatprep.subr.mxu0 0.0
  %879 = vmatpush1.msra.mxu0 0.0
  %880 = vmatprep.subr.mxu0 0.0
  %881 = vmatpush1.msra.mxu0 0.0
  %882 = vmatprep.subr.mxu0 0.0
  %883 = vmatpush1.msra.mxu0 0.0
  %884 = vmatprep.subr.mxu0 0.0
  %885 = vmatpush1.msra.mxu0 0.0
  %886 = vmatprep.subr.mxu0 0.0
  %887 = vmatpush1.msra.mxu0 0.0
  %888 = vmatprep.mubr.f32.mxu0 0.0
  %889 = vmatmul.mubr.f32.gmra.mrb[0].mxu0 %v768
  %v890 = vpop.f32.mrb[0].mxu0
  %v891 = vadd.f32 %v787, %v890
  %v892 = vpop.f32.mrb[0].mxu0
  %893 = vmatprep.mubr.f32.mxu0 0.0
  %894 = vmatmul.mubr.f32.gmra.mrb[0].mxu0 %v769
  %v895 = vpop.f32.mrb[0].mxu0
  %v896 = vadd.f32 %v792, %v895
  %v897 = vpop.f32.mrb[0].mxu0
  %898 = vmatprep.mubr.f32.mxu0 0.0
  %899 = vmatmul.mubr.f32.gmra.mrb[0].mxu0 %v770
  %v900 = vpop.f32.mrb[0].mxu0
  %v901 = vadd.f32 %v797, %v900
  %v902 = vpop.f32.mrb[0].mxu0
  %903 = vmatprep.mubr.f32.mxu0 0.0
  %904 = vmatmul.mubr.f32.gmra.mrb[0].mxu0 %v771
  %v905 = vpop.f32.mrb[0].mxu0
  %v906 = vadd.f32 %v802, %v905
  %v907 = vpop.f32.mrb[0].mxu0
  %908 = vmatprep.mubr.f32.mxu0 0.0
  %909 = vmatmul.mubr.f32.gmra.mrb[0].mxu0 %v772
  %v910 = vpop.f32.mrb[0].mxu0
  %v911 = vadd.f32 %v807, %v910
  %v912 = vpop.f32.mrb[0].mxu0
  %913 = vmatprep.mubr.f32.mxu0 0.0
  %914 = vmatmul.mubr.f32.gmra.mrb[0].mxu0 %v773
  %v915 = vpop.f32.mrb[0].mxu0
  %v916 = vadd.f32 %v812, %v915
  %v917 = vpop.f32.mrb[0].mxu0
  %918 = vmatprep.mubr.f32.mxu0 0.0
  %919 = vmatmul.mubr.f32.gmra.mrb[0].mxu0 %v774
  %v920 = vpop.f32.mrb[0].mxu0
  %v921 = vadd.f32 %v817, %v920
  %v922 = vpop.f32.mrb[0].mxu0
  %923 = vmatprep.mubr.f32.mxu0 0.0
  %924 = vmatmul.mubr.f32.gmra.mrb[0].mxu0 %v775
  %v925 = vpop.f32.mrb[0].mxu0
  %v926 = vadd.f32 %v822, %v925
  %v927 = vpop.f32.mrb[0].mxu0
  %928 = vdwg.mxu0
  %v929 = vmax.f32 %v891, 0.0
  %v930 = vmax.f32 %v896, 0.0
  %v931 = vmax.f32 %v901, 0.0
  %v932 = vmax.f32 %v906, 0.0
  %v933 = vmax.f32 %v911, 0.0
  %v934 = vmax.f32 %v916, 0.0
  %v935 = vmax.f32 %v921, 0.0
  %v936 = vmax.f32 %v926, 0.0
  %v937 = vld [vmem:[%s6] sm:$0xff]
  %v938 = vld [vmem:[%s7] sm:$0xff]
  %940 = vset.pattern.permute.xlu0 0
  %941 = vperm.xlu0 %940, %v938
  %v942 = vpop.permute.xlu0 %941
  %vm944 = vcmask 523264
  %v946 = vsel %vm944, %v937, 0
  %948 = vmatprep.subr.mxu0 0.0
  %949 = vmatpush1.msra.mxu0 %v929
  %950 = vmatprep.subr.mxu0 0.0
  %951 = vmatpush1.msra.mxu0 %v930
  %952 = vmatprep.subr.mxu0 0.0
  %953 = vmatpush1.msra.mxu0 %v931
  %954 = vmatprep.subr.mxu0 0.0
  %955 = vmatpush1.msra.mxu0 %v932
  %956 = vmatprep.subr.mxu0 0.0
  %957 = vmatpush1.msra.mxu0 %v933
  %958 = vmatprep.subr.mxu0 0.0
  %959 = vmatpush1.msra.mxu0 %v934
  %960 = vmatprep.subr.mxu0 0.0
  %961 = vmatpush1.msra.mxu0 %v935
  %962 = vmatprep.subr.mxu0 0.0
  %963 = vmatpush1.msra.mxu0 %v936
  %964 = vmatprep.subr.mxu0 0.0
  %965 = vmatpush1.msra.mxu0 0.0
  %966 = vmatprep.subr.mxu0 0.0
  %967 = vmatpush1.msra.mxu0 0.0
  %968 = vmatprep.subr.mxu0 0.0
  %969 = vmatpush1.msra.mxu0 0.0
  %970 = vmatprep.subr.mxu0 0.0
  %971 = vmatpush1.msra.mxu0 0.0
  %972 = vmatprep.subr.mxu0 0.0
  %973 = vmatpush1.msra.mxu0 0.0
  %974 = vmatprep.subr.mxu0 0.0
  %975 = vmatpush1.msra.mxu0 0.0
  %976 = vmatprep.subr.mxu0 0.0
  %977 = vmatpush1.msra.mxu0 0.0
  %978 = vmatprep.subr.mxu0 0.0
  %979 = vmatpush1.msra.mxu0 0.0
  %980 = vmatprep.subr.mxu0 0.0
  %981 = vmatpush1.msra.mxu0 0.0
  %982 = vmatprep.subr.mxu0 0.0
  %983 = vmatpush1.msra.mxu0 0.0
  %984 = vmatprep.subr.mxu0 0.0
  %985 = vmatpush1.msra.mxu0 0.0
  %986 = vmatprep.subr.mxu0 0.0
  %987 = vmatpush1.msra.mxu0 0.0
  %988 = vmatprep.subr.mxu0 0.0
  %989 = vmatpush1.msra.mxu0 0.0
  %990 = vmatprep.subr.mxu0 0.0
  %991 = vmatpush1.msra.mxu0 0.0
  %992 = vmatprep.subr.mxu0 0.0
  %993 = vmatpush1.msra.mxu0 0.0
  %994 = vmatprep.subr.mxu0 0.0
  %995 = vmatpush1.msra.mxu0 0.0
  %996 = vmatprep.subr.mxu0 0.0
  %997 = vmatpush1.msra.mxu0 0.0
  %998 = vmatprep.subr.mxu0 0.0
  %999 = vmatpush1.msra.mxu0 0.0
  %1000 = vmatprep.subr.mxu0 0.0
  %1001 = vmatpush1.msra.mxu0 0.0
  %1002 = vmatprep.subr.mxu0 0.0
  %1003 = vmatpush1.msra.mxu0 0.0
  %1004 = vmatprep.subr.mxu0 0.0
  %1005 = vmatpush1.msra.mxu0 0.0
  %1006 = vmatprep.subr.mxu0 0.0
  %1007 = vmatpush1.msra.mxu0 0.0
  %1008 = vmatprep.subr.mxu0 0.0
  %1009 = vmatpush1.msra.mxu0 0.0
  %1010 = vmatprep.subr.mxu0 0.0
  %1011 = vmatpush1.msra.mxu0 0.0
  %1012 = vmatprep.mubr.f32.mxu0 0.0
  %1013 = vmatmul.mubr.f32.gmra.mrb[0].mxu0 %v946
  %v1014 = vpop.f32.mrb[0].mxu0
  %v1015 = vadd.f32 %v942, %v1014
  %v1016 = vpop.f32.mrb[0].mxu0
  %1017 = vdwg.mxu0
  %v1018 = vmax.f32 %v1015, 0.0
  %v1019 = vand.u32 2147483647, %v1015
  %v1020 = vsub.f32 0.0, %v1019
  %v1021 = vmul.f32 %v1020, 1.442695
  %v1022 = vpow.pop %v1021
  %v1023 = vadd.f32 %v1022, 1.0
  %v1024 = vlog2.pop %v1023
  %v1025 = vmul.f32 %v1024, 0.6931472
  %v1026 = vmul.f32 -0.5, %v1022
  %v1027 = vadd.f32 %v1026, 1.0
  %v1028 = vmul.f32 %v1027, %v1022
  %v1029 = vand.u32 2147483647, %v1022
  %vm1030 = vcmp.lt.f32.partialorder %v1029, 0.0004427343
  %v1031 = vsel %vm1030, %v1028, %v1025
  %v1032 = vadd.f32 %v1018, %v1031
  %v1033 = vadd.f32 %v1032, 1.0
  %1034 = vst [vmem:[%s8] sm:$0xff] %v1033
  // Predicated region
  $region34: #{actor_forward.1} parent=0 // pred_check
    _
  $region35: #{actor_forward.1} parent=0 // pred_check_branch
    %1036 = sbr.rel (0) target = $region37
  $region36: #{actor_forward.1} parent=0 // pred_region
    _
  $region37: #{actor_forward.1} parent=0 // pred_fallthru
    _
  // Predicated region
  $region38: #{actor_forward.1} parent=0 // pred_check
    _
  $region39: #{actor_forward.1} parent=0 // pred_check_branch
    %1038 = sbr.rel (0) target = $region41
  $region40: #{actor_forward.1} parent=0 // pred_region
    _
  $region41: #{actor_forward.1} parent=0 // pred_fallthru
    _

</llo_original>
